<compile_context>
chip_gen: v6e
topology: v6e:2x2x1
jax: 0.10.0
libtpu: 0.0.40
codegen_flags: <defaults>
</compile_context>

<pallas_src>
import functools

import jax
import jax.numpy as jnp
from jax.experimental import pallas as pl
from jax.experimental.pallas import tpu as pltpu

LANE = 128      # vreg lane width
SUBLANE = 8     # f32 sublane count


def _cdiv(a, b):
    return (a + b - 1) // b


def _round_up(n, m):
    return _cdiv(n, m) * m


def _mlp_kernel(x_ref, w1_ref, b1_ref, w2_ref, b2_ref, w3_ref, b3_ref, o_ref):
    # In-kernel bf16 cast of the streamed f32 x tile (hides under the DMA).
    x = x_ref[...].astype(jnp.bfloat16)
    # Layer 1: bf16 MXU matmul, f32 accumulate; bias-add / ReLU in f32 (VPU).
    h = jnp.dot(x, w1_ref[...], preferred_element_type=jnp.float32)
    h = jnp.maximum(h + b1_ref[...], 0.0)
    # Layer 2: narrow back to bf16 for the MXU, keep f32 accumulate + epilogue.
    h = jnp.dot(h.astype(w2_ref.dtype), w2_ref[...],
                preferred_element_type=jnp.float32)
    h = jnp.maximum(h + b2_ref[...], 0.0)
    # Layer 3: logits, no activation; tile is written at true output width.
    out = jnp.dot(h.astype(w3_ref.dtype), w3_ref[...],
                  preferred_element_type=jnp.float32)
    o_ref[...] = (out + b3_ref[...]).astype(o_ref.dtype)


def prepare_params(params):
    """One-time weight prep (call once; NOT inside the per-step forward).

    * casts matmul weights to bf16 (biases stay f32 for the f32 epilogue),
    * zero-pads the hidden dim to a multiple of 128 so intermediate h tiles
      are lane-dense and MXU K/N are full.  Padded rows/cols are exact zeros
      and ReLU(0 + 0) == 0, so results are unchanged.
    """
    hid = params["w1"].shape[1]
    ph = _round_up(hid, LANE) - hid
    return dict(
        w1=jnp.pad(params["w1"].astype(jnp.bfloat16), ((0, 0), (0, ph))),
        b1=jnp.pad(params["b1"], ((0, 0), (0, ph))),
        w2=jnp.pad(params["w2"].astype(jnp.bfloat16), ((0, ph), (0, ph))),
        b2=jnp.pad(params["b2"], ((0, 0), (0, ph))),
        w3=jnp.pad(params["w3"].astype(jnp.bfloat16), ((0, ph), (0, 0))),
        b3=params["b3"],
    )


def _resident_spec(shape):
    """Constant index_map -> DMA'd once, VMEM-resident across grid steps.

    Buffered(1): a weight that never changes block index does not need a
    second pipeline buffer.  Fall back to the default if this jax build does
    not expose pipeline_mode / Buffered.
    """
    try:
        return pl.BlockSpec(shape, lambda i: (0, 0),
                            pipeline_mode=pl.Buffered(1))
    except (AttributeError, TypeError):
        return pl.BlockSpec(shape, lambda i: (0, 0))


@functools.partial(jax.jit, static_argnames=("block_m",))
def neural_net_forward(x, prepped, block_m=512):
    """Fused forward pass for NeuralNet.

    x: [B, input_size] float32
    prepped: output of prepare_params() (bf16 weights, hidden padded to 128)
    returns: [B, output_size] float32

    block_m: max batch-tile rows.  Sweep {512, 1024, 2048} on v6e (128 MiB
    VMEM); keep <= 512 on v5e / v7x unless vmem budget allows more.
    """
    B, d_in = x.shape
    hid_p = prepped["w1"].shape[1]
    out_size = prepped["w3"].shape[1]

    # Defensive: batch tile must be a multiple of 8 sublanes.
    block_m = max(SUBLANE, _round_up(int(block_m), SUBLANE))

    # Split B evenly into tiles (no padding up to a fixed multiple of 512).
    # Prefer >= 2 grid steps so the x DMA pipelines against compute and the
    # batch axis can shard across v7x's two TensorCores.
    n_tiles = _cdiv(B, block_m)
    if B > SUBLANE:
        n_tiles = max(n_tiles, 2)
    tm = _round_up(_cdiv(B, n_tiles), SUBLANE)
    b_pad = _round_up(B, tm)
    grid = (b_pad // tm,)

    if b_pad != B:
        x = jnp.pad(x, ((0, b_pad - B), (0, 0)))

    # Explicit VMEM budget: f32 x / f32 out tiles double-buffered, bf16
    # weights + f32 biases single-buffered, plus the two f32 intermediate
    # activations; 2x headroom, capped at v7x's 64 MiB physical VMEM per TC.
    est = (2 * tm * d_in * 4                                   # x tiles
           + 2 * tm * out_size * 4                             # out tiles
           + (d_in * hid_p + hid_p * hid_p + hid_p * out_size) * 2   # weights
           + (2 * hid_p + out_size) * 4                        # biases
           + 2 * tm * hid_p * 4)                               # intermediates
    vmem_limit = int(min(max(2 * est + (1 << 20), 16 << 20), 64 << 20))

    out = pl.pallas_call(
        _mlp_kernel,
        out_shape=jax.ShapeDtypeStruct((b_pad, out_size), jnp.float32),
        grid=grid,
        in_specs=[
            # x: streamed f32 batch tiles (default double-buffering; on v7x
            # try pipeline_mode=pl.Buffered(3) here if the x DMA is exposed).
            pl.BlockSpec((tm, d_in), lambda i: (i, 0)),
            _resident_spec((d_in, hid_p)),      # w1
            _resident_spec((1, hid_p)),         # b1
            _resident_spec((hid_p, hid_p)),     # w2
            _resident_spec((1, hid_p)),         # b2
            _resident_spec((hid_p, out_size)),  # w3
            _resident_spec((1, out_size)),      # b3
        ],
        out_specs=pl.BlockSpec((tm, out_size), lambda i: (i, 0)),
        compiler_params=pltpu.CompilerParams(
            # "parallel" lets the batch grid shard across TCs on v7x (no-op on
            # v5e/v6e single-TC parts).
            dimension_semantics=("parallel",),
            vmem_limit_bytes=vmem_limit,
        ),
    )(x, prepped["w1"], prepped["b1"], prepped["w2"], prepped["b2"],
      prepped["w3"], prepped["b3"])

    return out if b_pad == B else out[:B]


def init_params(key, input_size, hidden_size, output_size):
    """Deterministic init mimicking PyTorch nn.Linear U(-1/sqrt(fan_in), +)."""
    ks = jax.random.split(key, 6)

    def linear(kw, kb, fan_in, fan_out):
        bound = 1.0 / jnp.sqrt(jnp.float32(fan_in))
        # stored as [fan_in, fan_out] (transposed relative to PyTorch [out, in])
        w = jax.random.uniform(kw, (fan_in, fan_out), jnp.float32, -bound, bound)
        b = jax.random.uniform(kb, (1, fan_out), jnp.float32, -bound, bound)
        return w, b

    w1, b1 = linear(ks[0], ks[1], input_size, hidden_size)
    w2, b2 = linear(ks[2], ks[3], hidden_size, hidden_size)
    w3, b3 = linear(ks[4], ks[5], hidden_size, output_size)
    return dict(w1=w1, b1=b1, w2=w2, b2=b2, w3=w3, b3=b3)


def _reference(x, p):
    h = jnp.maximum(x @ p["w1"] + p["b1"], 0.0)
    h = jnp.maximum(h @ p["w2"] + p["b2"], 0.0)
    return h @ p["w3"] + p["b3"]


if __name__ == "__main__":
    # Synthetic sizes standing in for data.pth's (input_size, hidden_size,
    # output_size).  batch=12 exercises >1 grid step and the ragged last tile.
    input_size, hidden_size, output_size = 64, 32, 16
    batch = 12

    key = jax.random.PRNGKey(0)
    kx, kp = jax.random.split(key)
    x = jax.random.normal(kx, (batch, input_size), jnp.float32)
    params = init_params(kp, input_size, hidden_size, output_size)
    prepped = prepare_params(params)   # one-time bf16 / padding weight prep

    out = neural_net_forward(x, prepped)
    out = jax.block_until_ready(out)

    ref = _reference(x, params)
    assert out.shape == (batch, output_size), out.shape
    # bf16 matmul operands with f32 accumulation vs f32 reference -> loose tol.
    assert jnp.allclose(out, ref, atol=2e-2, rtol=2e-2), float(
        jnp.max(jnp.abs(out - ref)))

    print("KERNEL_OK")
</pallas_src>

<mosaic_0001>
module attributes {stable_mosaic.version = 11 : i64} {
  func.func @_mlp_kernel(%arg0: i32, %arg1: memref<8x64xf32, #tpu.memory_space<vmem>>, %arg2: memref<64x128xbf16, #tpu.memory_space<vmem>>, %arg3: memref<1x128xf32, #tpu.memory_space<vmem>>, %arg4: memref<128x128xbf16, #tpu.memory_space<vmem>>, %arg5: memref<1x128xf32, #tpu.memory_space<vmem>>, %arg6: memref<128x16xbf16, #tpu.memory_space<vmem>>, %arg7: memref<1x16xf32, #tpu.memory_space<vmem>>, %arg8: memref<8x16xf32, #tpu.memory_space<vmem>>) attributes {dimension_semantics = [#tpu.dimension_semantics<parallel>], iteration_bounds = array<i64: 2>, scalar_prefetch = 0 : i64, scratch_operands = 0 : i64, tpu.core_type = #tpu.core_type<tc>, window_params = [{transform_indices = @transform_0, window_bounds = array<i64: 8, 64>}, {pipeline_mode = #tpu.pipeline_mode<synchronous>, transform_indices = @transform_1, window_bounds = array<i64: 64, 128>}, {pipeline_mode = #tpu.pipeline_mode<synchronous>, transform_indices = @transform_2, window_bounds = array<i64: 1, 128>}, {pipeline_mode = #tpu.pipeline_mode<synchronous>, transform_indices = @transform_3, window_bounds = array<i64: 128, 128>}, {pipeline_mode = #tpu.pipeline_mode<synchronous>, transform_indices = @transform_4, window_bounds = array<i64: 1, 128>}, {pipeline_mode = #tpu.pipeline_mode<synchronous>, transform_indices = @transform_5, window_bounds = array<i64: 128, 16>}, {pipeline_mode = #tpu.pipeline_mode<synchronous>, transform_indices = @transform_6, window_bounds = array<i64: 1, 16>}, {transform_indices = @transform_7, window_bounds = array<i64: 8, 16>}]} {
    %c0 = arith.constant 0 : index
    %c0_0 = arith.constant 0 : index
    %0 = vector.load %arg1[%c0, %c0_0] : memref<8x64xf32, #tpu.memory_space<vmem>>, vector<8x64xf32>
    %1 = arith.truncf %0 : vector<8x64xf32> to vector<8x64xbf16>
    %c0_1 = arith.constant 0 : index
    %c0_2 = arith.constant 0 : index
    %2 = vector.load %arg2[%c0_1, %c0_2] : memref<64x128xbf16, #tpu.memory_space<vmem>>, vector<64x128xbf16>
    %cst = arith.constant dense<0.000000e+00> : vector<8x128xf32>
    %3 = tpu.matmul %1, %2, %cst {dimension_numbers = #tpu.dot_dimension_numbers<[1], [0], [0], [1], [0, 0, 1, 1], [], []>} : vector<8x64xbf16>, vector<64x128xbf16>, vector<8x128xf32> -> vector<8x128xf32>
    %c0_3 = arith.constant 0 : index
    %c0_4 = arith.constant 0 : index
    %4 = vector.load %arg3[%c0_3, %c0_4] : memref<1x128xf32, #tpu.memory_space<vmem>>, vector<1x128xf32>
    %5 = vector.broadcast %4 : vector<1x128xf32> to vector<8x128xf32>
    %6 = arith.addf %3, %5 : vector<8x128xf32>
    %cst_5 = arith.constant 0.000000e+00 : f32
    %7 = vector.broadcast %cst_5 : f32 to vector<8x128xf32>
    %8 = arith.maximumf %6, %7 : vector<8x128xf32>
    %9 = arith.truncf %8 : vector<8x128xf32> to vector<8x128xbf16>
    %c0_6 = arith.constant 0 : index
    %c0_7 = arith.constant 0 : index
    %10 = vector.load %arg4[%c0_6, %c0_7] : memref<128x128xbf16, #tpu.memory_space<vmem>>, vector<128x128xbf16>
    %cst_8 = arith.constant dense<0.000000e+00> : vector<8x128xf32>
    %11 = tpu.matmul %9, %10, %cst_8 {dimension_numbers = #tpu.dot_dimension_numbers<[1], [0], [0], [1], [0, 0, 1, 1], [], []>} : vector<8x128xbf16>, vector<128x128xbf16>, vector<8x128xf32> -> vector<8x128xf32>
    %c0_9 = arith.constant 0 : index
    %c0_10 = arith.constant 0 : index
    %12 = vector.load %arg5[%c0_9, %c0_10] : memref<1x128xf32, #tpu.memory_space<vmem>>, vector<1x128xf32>
    %13 = vector.broadcast %12 : vector<1x128xf32> to vector<8x128xf32>
    %14 = arith.addf %11, %13 : vector<8x128xf32>
    %cst_11 = arith.constant 0.000000e+00 : f32
    %15 = vector.broadcast %cst_11 : f32 to vector<8x128xf32>
    %16 = arith.maximumf %14, %15 : vector<8x128xf32>
    %17 = arith.truncf %16 : vector<8x128xf32> to vector<8x128xbf16>
    %c0_12 = arith.constant 0 : index
    %c0_13 = arith.constant 0 : index
    %18 = vector.load %arg6[%c0_12, %c0_13] : memref<128x16xbf16, #tpu.memory_space<vmem>>, vector<128x16xbf16>
    %cst_14 = arith.constant dense<0.000000e+00> : vector<8x16xf32>
    %19 = tpu.matmul %17, %18, %cst_14 {dimension_numbers = #tpu.dot_dimension_numbers<[1], [0], [0], [1], [0, 0, 1, 1], [], []>} : vector<8x128xbf16>, vector<128x16xbf16>, vector<8x16xf32> -> vector<8x16xf32>
    %c0_15 = arith.constant 0 : index
    %c0_16 = arith.constant 0 : index
    %20 = vector.load %arg7[%c0_15, %c0_16] : memref<1x16xf32, #tpu.memory_space<vmem>>, vector<1x16xf32>
    %21 = vector.broadcast %20 : vector<1x16xf32> to vector<8x16xf32>
    %22 = arith.addf %19, %21 : vector<8x16xf32>
    %c0_17 = arith.constant 0 : index
    %c0_18 = arith.constant 0 : index
    %23 = vector.load %arg8[%c0_17, %c0_18] : memref<8x16xf32, #tpu.memory_space<vmem>>, vector<8x16xf32>
    tpu.vector_store %arg8[%c0_17, %c0_18], %22 {strides = array<i32>} : memref<8x16xf32, #tpu.memory_space<vmem>>, vector<8x16xf32>,
    return
  }
  func.func @transform_0(%arg0: i32) -> (i32, i32) {
    %c0_i32 = arith.constant 0 : i32
    %c0_i32_0 = arith.constant 0 : i32
    return %arg0, %c0_i32 : i32, i32
  }
  func.func @transform_1(%arg0: i32) -> (i32, i32) {
    %c0_i32 = arith.constant 0 : i32
    %c0_i32_0 = arith.constant 0 : i32
    %c0_i32_1 = arith.constant 0 : i32
    return %c0_i32, %c0_i32_0 : i32, i32
  }
  func.func @transform_2(%arg0: i32) -> (i32, i32) {
    %c0_i32 = arith.constant 0 : i32
    %c0_i32_0 = arith.constant 0 : i32
    %c0_i32_1 = arith.constant 0 : i32
    return %c0_i32, %c0_i32_0 : i32, i32
  }
  func.func @transform_3(%arg0: i32) -> (i32, i32) {
    %c0_i32 = arith.constant 0 : i32
    %c0_i32_0 = arith.constant 0 : i32
    %c0_i32_1 = arith.constant 0 : i32
    return %c0_i32, %c0_i32_0 : i32, i32
  }
  func.func @transform_4(%arg0: i32) -> (i32, i32) {
    %c0_i32 = arith.constant 0 : i32
    %c0_i32_0 = arith.constant 0 : i32
    %c0_i32_1 = arith.constant 0 : i32
    return %c0_i32, %c0_i32_0 : i32, i32
  }
  func.func @transform_5(%arg0: i32) -> (i32, i32) {
    %c0_i32 = arith.constant 0 : i32
    %c0_i32_0 = arith.constant 0 : i32
    %c0_i32_1 = arith.constant 0 : i32
    return %c0_i32, %c0_i32_0 : i32, i32
  }
  func.func @transform_6(%arg0: i32) -> (i32, i32) {
    %c0_i32 = arith.constant 0 : i32
    %c0_i32_0 = arith.constant 0 : i32
    %c0_i32_1 = arith.constant 0 : i32
    return %c0_i32, %c0_i32_0 : i32, i32
  }
  func.func @transform_7(%arg0: i32) -> (i32, i32) {
    %c0_i32 = arith.constant 0 : i32
    %c0_i32_0 = arith.constant 0 : i32
    return %arg0, %c0_i32 : i32, i32
  }
}

</mosaic_0001>

<llo_original>
// kernel: neural_net_forward.1
$region0: #{neural_net_forward.1}
  #allocation0 [shape = 'u32[]', space=smem, size = 0x4, offset = 0x4, fixed_abs, tag = 'smem constant byte address 0x4 - core index']
  #allocation1 [shape = 'u32[144,128]{1,0:T(1,128)}', space=vmem, size = 0x12000, scoped, tag = 'internal scratch']
  %s0 = inlined_call_operand.vmem [shape: f32[16,64], index: 0, kind: input, shape index: {}]
  %s1 = inlined_call_operand.vmem [shape: bf16[64,128], index: 1, kind: input, shape index: {}]
  %s2 = inlined_call_operand.vmem [shape: f32[1,128], index: 2, kind: input, shape index: {}]
  %s3 = inlined_call_operand.vmem [shape: bf16[128,128], index: 3, kind: input, shape index: {}]
  %s4 = inlined_call_operand.vmem [shape: f32[1,128], index: 4, kind: input, shape index: {}]
  %s5 = inlined_call_operand.vmem [shape: bf16[128,16], index: 5, kind: input, shape index: {}]
  %s6 = inlined_call_operand.vmem [shape: f32[1,16], index: 6, kind: input, shape index: {}]
  %s7 = inlined_call_operand.hbm [shape: f32[16,16], index: 7, kind: output, shape index: {}]
  %s8 = sld [smem:[#allocation0]]
  $region61: #{neural_net_forward.1} parent=0
    _
  %s10 = ssub.s32 1, %s8
  %s11 = scalar_select 0, %s10, %s8
  $region1: #{neural_net_forward.1} parent=0
    #allocation2 [shape = 'u8[8192]{0}', space=vmem, size = 0x2000, scoped, tag = 'output window, operand 0']
    #allocation3 [shape = 's32[2]{0}', space=sflag, size = 0x8, scoped, tag = 'scoped memory for neural_net_forward.1']
    %12 = vsyncpa [#allocation3], 0
    %s13 = scalar_lea.sflag [#allocation3], 1
    %14 = vsyncpa %s13, 0
    loop: start=0, step=1, limit=4
    $region2: #{neural_net_forward.1} parent=1 // loop_pre_header
      _
    $region3: #{neural_net_forward.1} parent=1 // loop_header
      %s16 = sphi 0, %s20
      %p17 = scmp.ge.s32.totalorder %s16, 4
      %s26 = sphi 0, %s28
      %s29 = sphi 0, %s26
      %s30 = sphi 0, %s29
      %s46 = sphi 0, %s30
      %s50 = sphi 0, %s50
      %s52 = sphi 0, %s50
      %s53 = sphi 0, %s52
      %s67 = sphi 0, %s53
      %s71 = sphi 0, %s71
      %s73 = sphi 0, %s71
      %s74 = sphi 0, %s73
      %s88 = sphi 0, %s74
      %s92 = sphi 0, %s92
      %s94 = sphi 0, %s92
      %s95 = sphi 0, %s94
      %s109 = sphi 0, %s95
      %s113 = sphi 0, %s113
      %s115 = sphi 0, %s113
      %s116 = sphi 0, %s115
      %s130 = sphi 0, %s116
      %s134 = sphi 0, %s134
      %s136 = sphi 0, %s134
      %s137 = sphi 0, %s136
      %s151 = sphi 0, %s137
      %s155 = sphi 0, %s155
      %s157 = sphi 0, %s155
      %s158 = sphi 0, %s157
      %s172 = sphi 0, %s158
      %s178 = sphi 0, %s180
      %s181 = sphi 0, %s178
      %s182 = sphi 0, %s181
      %s198 = sphi 0, %s182
    $region4: #{neural_net_forward.1} parent=1 // loop_header_branch
      %19 = sbr.rel (%p17) target = $region8
    $region5: #{neural_net_forward.1} parent=1 // loop_body
      %s21 = ssub.s32 %s16, 1
      %s22 = ssub.s32 %s16, 2
      %s23 = sadd.s32 %s16, 1
      %s24 = ssub.s32 %s16, %s23
      %p25 = scmp.eq.s32.totalorder %s24, 0
      %s27 = sadd.s32 %s26, 1
      %s28 = scalar_select %p25, %s26, %s27
      %p31 = pneg %p25
      %p32 = scmp.eq.s32.totalorder %s16, 1
      %p33 = por %p31, %p32
      %p34 = scmp.ne.s32.totalorder %s26, %s29
      %p35 = scmp.eq.s32.totalorder %s16, 0
      %p36 = por %p34, %p35
      %p37 = scmp.ne.s32.totalorder %s26, %s29
      %p38 = scmp.eq.s32.totalorder %s21, 1
      %p39 = por %p37, %p38
      %p40 = scmp.ne.s32.totalorder %s29, %s30
      %p41 = scmp.eq.s32.totalorder %s21, 0
      %p42 = por %p40, %p41
      %p43 = scmp.ne.s32.totalorder %s29, %s30
      %p44 = scmp.eq.s32.totalorder %s22, 1
      %p45 = por %p43, %p44
      %p47 = scmp.ne.s32.totalorder %s30, %s46
      %p48 = scmp.eq.s32.totalorder %s22, 0
      %p49 = por %p47, %p48
      %s51 = sadd.s32 %s50, 1
      %p54 = scmp.eq.s32.totalorder %s16, 1
      %p55 = scmp.ne.s32.totalorder %s50, %s52
      %p56 = scmp.eq.s32.totalorder %s16, 0
      %p57 = por %p55, %p56
      %p58 = scmp.ne.s32.totalorder %s50, %s52
      %p59 = scmp.eq.s32.totalorder %s21, 1
      %p60 = por %p58, %p59
      %p61 = scmp.ne.s32.totalorder %s52, %s53
      %p62 = scmp.eq.s32.totalorder %s21, 0
      %p63 = por %p61, %p62
      %p64 = scmp.ne.s32.totalorder %s52, %s53
      %p65 = scmp.eq.s32.totalorder %s22, 1
      %p66 = por %p64, %p65
      %p68 = scmp.ne.s32.totalorder %s53, %s67
      %p69 = scmp.eq.s32.totalorder %s22, 0
      %p70 = por %p68, %p69
      %s72 = sadd.s32 %s71, 1
      %p75 = scmp.eq.s32.totalorder %s16, 1
      %p76 = scmp.ne.s32.totalorder %s71, %s73
      %p77 = scmp.eq.s32.totalorder %s16, 0
      %p78 = por %p76, %p77
      %p79 = scmp.ne.s32.totalorder %s71, %s73
      %p80 = scmp.eq.s32.totalorder %s21, 1
      %p81 = por %p79, %p80
      %p82 = scmp.ne.s32.totalorder %s73, %s74
      %p83 = scmp.eq.s32.totalorder %s21, 0
      %p84 = por %p82, %p83
      %p85 = scmp.ne.s32.totalorder %s73, %s74
      %p86 = scmp.eq.s32.totalorder %s22, 1
      %p87 = por %p85, %p86
      %p89 = scmp.ne.s32.totalorder %s74, %s88
      %p90 = scmp.eq.s32.totalorder %s22, 0
      %p91 = por %p89, %p90
      %s93 = sadd.s32 %s92, 1
      %p96 = scmp.eq.s32.totalorder %s16, 1
      %p97 = scmp.ne.s32.totalorder %s92, %s94
      %p98 = scmp.eq.s32.totalorder %s16, 0
      %p99 = por %p97, %p98
      %p100 = scmp.ne.s32.totalorder %s92, %s94
      %p101 = scmp.eq.s32.totalorder %s21, 1
      %p102 = por %p100, %p101
      %p103 = scmp.ne.s32.totalorder %s94, %s95
      %p104 = scmp.eq.s32.totalorder %s21, 0
      %p105 = por %p103, %p104
      %p106 = scmp.ne.s32.totalorder %s94, %s95
      %p107 = scmp.eq.s32.totalorder %s22, 1
      %p108 = por %p106, %p107
      %p110 = scmp.ne.s32.totalorder %s95, %s109
      %p111 = scmp.eq.s32.totalorder %s22, 0
      %p112 = por %p110, %p111
      %s114 = sadd.s32 %s113, 1
      %p117 = scmp.eq.s32.totalorder %s16, 1
      %p118 = scmp.ne.s32.totalorder %s113, %s115
      %p119 = scmp.eq.s32.totalorder %s16, 0
      %p120 = por %p118, %p119
      %p121 = scmp.ne.s32.totalorder %s113, %s115
      %p122 = scmp.eq.s32.totalorder %s21, 1
      %p123 = por %p121, %p122
      %p124 = scmp.ne.s32.totalorder %s115, %s116
      %p125 = scmp.eq.s32.totalorder %s21, 0
      %p126 = por %p124, %p125
      %p127 = scmp.ne.s32.totalorder %s115, %s116
      %p128 = scmp.eq.s32.totalorder %s22, 1
      %p129 = por %p127, %p128
      %p131 = scmp.ne.s32.totalorder %s116, %s130
      %p132 = scmp.eq.s32.totalorder %s22, 0
      %p133 = por %p131, %p132
      %s135 = sadd.s32 %s134, 1
      %p138 = scmp.eq.s32.totalorder %s16, 1
      %p139 = scmp.ne.s32.totalorder %s134, %s136
      %p140 = scmp.eq.s32.totalorder %s16, 0
      %p141 = por %p139, %p140
      %p142 = scmp.ne.s32.totalorder %s134, %s136
      %p143 = scmp.eq.s32.totalorder %s21, 1
      %p144 = por %p142, %p143
      %p145 = scmp.ne.s32.totalorder %s136, %s137
      %p146 = scmp.eq.s32.totalorder %s21, 0
      %p147 = por %p145, %p146
      %p148 = scmp.ne.s32.totalorder %s136, %s137
      %p149 = scmp.eq.s32.totalorder %s22, 1
      %p150 = por %p148, %p149
      %p152 = scmp.ne.s32.totalorder %s137, %s151
      %p153 = scmp.eq.s32.totalorder %s22, 0
      %p154 = por %p152, %p153
      %s156 = sadd.s32 %s155, 1
      %p159 = scmp.eq.s32.totalorder %s16, 1
      %p160 = scmp.ne.s32.totalorder %s155, %s157
      %p161 = scmp.eq.s32.totalorder %s16, 0
      %p162 = por %p160, %p161
      %p163 = scmp.ne.s32.totalorder %s155, %s157
      %p164 = scmp.eq.s32.totalorder %s21, 1
      %p165 = por %p163, %p164
      %p166 = scmp.ne.s32.totalorder %s157, %s158
      %p167 = scmp.eq.s32.totalorder %s21, 0
      %p168 = por %p166, %p167
      %p169 = scmp.ne.s32.totalorder %s157, %s158
      %p170 = scmp.eq.s32.totalorder %s22, 1
      %p171 = por %p169, %p170
      %p173 = scmp.ne.s32.totalorder %s158, %s172
      %p174 = scmp.eq.s32.totalorder %s22, 0
      %p175 = por %p173, %p174
      %s176 = ssub.s32 %s16, %s23
      %p177 = scmp.eq.s32.totalorder %s176, 0
      %s179 = sadd.s32 %s178, 1
      %s180 = scalar_select %p177, %s178, %s179
      %p183 = pneg %p177
      %p184 = scmp.eq.s32.totalorder %s16, 1
      %p185 = por %p183, %p184
      %p186 = scmp.ne.s32.totalorder %s178, %s181
      %p187 = scmp.eq.s32.totalorder %s16, 0
      %p188 = por %p186, %p187
      %p189 = scmp.ne.s32.totalorder %s178, %s181
      %p190 = scmp.eq.s32.totalorder %s21, 1
      %p191 = por %p189, %p190
      %p192 = scmp.ne.s32.totalorder %s181, %s182
      %p193 = scmp.eq.s32.totalorder %s21, 0
      %p194 = por %p192, %p193
      %p195 = scmp.ne.s32.totalorder %s181, %s182
      %p196 = scmp.eq.s32.totalorder %s22, 1
      %p197 = por %p195, %p196
      %p199 = scmp.ne.s32.totalorder %s182, %s198
      %p200 = scmp.eq.s32.totalorder %s22, 0
      %p201 = por %p199, %p200
      %p202 = scmp.le.s32.totalorder 1, %s16
      %p203 = scmp.lt.s32.totalorder %s16, 3
      %p204 = pnand %p202, %p203
      %p205 = pneg %p204
      // Predicated region
      $region9: #{neural_net_forward.1} parent=5 // pred_check
        _
      $region10: #{neural_net_forward.1} parent=5 // pred_check_branch
        %207 = sbr.rel (%p204) target = $region12
      $region11: #{neural_net_forward.1} parent=5 // pred_region
        %s208 = ssub.s32 %s16, 1
        // Predicated region
        $region13: #{neural_net_forward.1} parent=11 // pred_check
          %p209 = pneg %p63
        $region14: #{neural_net_forward.1} parent=11 // pred_check_branch
          %211 = sbr.rel (%p209) target = $region16
        $region15: #{neural_net_forward.1} parent=11 // pred_region
          _
        $region16: #{neural_net_forward.1} parent=11 // pred_fallthru
          _
        // Predicated region
        $region17: #{neural_net_forward.1} parent=11 // pred_check
          %p212 = pneg %p84
        $region18: #{neural_net_forward.1} parent=11 // pred_check_branch
          %214 = sbr.rel (%p212) target = $region20
        $region19: #{neural_net_forward.1} parent=11 // pred_region
          _
        $region20: #{neural_net_forward.1} parent=11 // pred_fallthru
          _
        // Predicated region
        $region21: #{neural_net_forward.1} parent=11 // pred_check
          %p215 = pneg %p105
        $region22: #{neural_net_forward.1} parent=11 // pred_check_branch
          %217 = sbr.rel (%p215) target = $region24
        $region23: #{neural_net_forward.1} parent=11 // pred_region
          _
        $region24: #{neural_net_forward.1} parent=11 // pred_fallthru
          _
        // Predicated region
        $region25: #{neural_net_forward.1} parent=11 // pred_check
          %p218 = pneg %p126
        $region26: #{neural_net_forward.1} parent=11 // pred_check_branch
          %220 = sbr.rel (%p218) target = $region28
        $region27: #{neural_net_forward.1} parent=11 // pred_region
          _
        $region28: #{neural_net_forward.1} parent=11 // pred_fallthru
          _
        // Predicated region
        $region29: #{neural_net_forward.1} parent=11 // pred_check
          %p221 = pneg %p147
        $region30: #{neural_net_forward.1} parent=11 // pred_check_branch
          %223 = sbr.rel (%p221) target = $region32
        $region31: #{neural_net_forward.1} parent=11 // pred_region
          _
        $region32: #{neural_net_forward.1} parent=11 // pred_fallthru
          _
        // Predicated region
        $region33: #{neural_net_forward.1} parent=11 // pred_check
          %p224 = pneg %p168
        $region34: #{neural_net_forward.1} parent=11 // pred_check_branch
          %226 = sbr.rel (%p224) target = $region36
        $region35: #{neural_net_forward.1} parent=11 // pred_region
          _
        $region36: #{neural_net_forward.1} parent=11 // pred_fallthru
          _
      $region12: #{neural_net_forward.1} parent=5 // pred_fallthru
        _
      %p227 = scmp.lt.s32.totalorder %s16, 2
      // Predicated region
      $region37: #{neural_net_forward.1} parent=5 // pred_check
        %p228 = pneg %p227
      $region38: #{neural_net_forward.1} parent=5 // pred_check_branch
        %230 = sbr.rel (%p228) target = $region40
      $region39: #{neural_net_forward.1} parent=5 // pred_region
        // Predicated region
        $region41: #{neural_net_forward.1} parent=39 // pred_check
          %p231 = pneg %p36
        $region42: #{neural_net_forward.1} parent=39 // pred_check_branch
          %233 = sbr.rel (%p231) target = $region44
        $region43: #{neural_net_forward.1} parent=39 // pred_region
          %p234 = scmp.lt.s32.totalorder %s16, 1
          %s235 = scalar_select %p234, %s16, 1
          %s236 = smul.addr %s235, 8
          %s237 = scalar_lea.vmem %s0, %s236
        $region44: #{neural_net_forward.1} parent=39 // pred_fallthru
          _
      $region40: #{neural_net_forward.1} parent=5 // pred_fallthru
        _
      %p238 = scmp.le.s32.totalorder 1, %s16
      %p239 = scmp.lt.s32.totalorder %s16, 3
      %p240 = pnand %p238, %p239
      %p241 = pneg %p240
      // Predicated region
      $region45: #{neural_net_forward.1} parent=5 // pred_check
        _
      $region46: #{neural_net_forward.1} parent=5 // pred_check_branch
        %243 = sbr.rel (%p240) target = $region48
      $region47: #{neural_net_forward.1} parent=5 // pred_region
        %s244 = ssub.s32 %s16, 1
        %p245 = scmp.lt.s32.totalorder %s21, 1
        %s246 = scalar_select %p245, %s21, 1
        %s247 = smul.addr %s246, 8
        %s248 = scalar_lea.vmem %s0, %s247
        %p249 = pneg %p42
        %p250 = pneg %p39
        %p251 = pneg %p63
        %p252 = pneg %p60
        %p253 = pneg %p84
        %p254 = pneg %p81
        %p255 = pneg %p105
        %p256 = pneg %p102
        %p257 = pneg %p126
        %p258 = pneg %p123
        %p259 = pneg %p147
        %p260 = pneg %p144
        %p261 = pneg %p168
        %p262 = pneg %p165
        %p263 = pneg %p194
        %p264 = pneg %p191
        %s265 = sand.u32 %s181, 1
        %s266 = scalar_lea.sflag [#allocation3], %s265
        %s267 = sand.u32 %s181, 1
        %s268 = smul.addr %s267, 8
        %s269 = scalar_lea.vmem [#allocation2], %s268
        %p270 = scmp.lt.s32.totalorder %s21, 1
        %s271 = scalar_select %p270, %s21, 1
        %s272 = smul.addr %s271, 8
        %s273 = scalar_lea.vmem %s0, %s272
        %v275 = vld [vmem:[%s273] sm:$0xff]
        %v276 = vpack.c.bf16 %v275, %v275
        %v277 = vld [vmem:[%s1] sm:$0xf]
        %v278 = vld [vmem:[%s1 + $0x4] sm:$0xf]
        %v279 = vld [vmem:[%s1 + $0x8] sm:$0xf]
        %v280 = vld [vmem:[%s1 + $0xc] sm:$0xf]
        %v281 = vld [vmem:[%s1 + $0x10] sm:$0xf]
        %v282 = vld [vmem:[%s1 + $0x14] sm:$0xf]
        %v283 = vld [vmem:[%s1 + $0x18] sm:$0xf]
        %v284 = vld [vmem:[%s1 + $0x1c] sm:$0xf]
        %v285 = vld [vmem:[%s2] sm:$0x1]
        %v287 = vlaneseq
        %v288 = vshrl.u32 %v287, 7
        %v289 = vsub.s32 0, %v288
        %v290 = vrot.slane %v285, %v289
        %v300 = vunpack.c.l.b16 %v277
        %v301 = vunpack.c.l.b16 %v278
        %v302 = vunpack.c.l.b16 %v279
        %v303 = vunpack.c.l.b16 %v280
        %v304 = vunpack.c.l.b16 %v281
        %v305 = vunpack.c.l.b16 %v282
        %v306 = vunpack.c.l.b16 %v283
        %v307 = vunpack.c.l.b16 %v284
        %v308 = vpack.c.b16 %v301, %v300
        %v309 = vpack.c.b16 %v303, %v302
        %v310 = vpack.c.b16 %v305, %v304
        %v311 = vpack.c.b16 %v307, %v306
        %vm316 = vcmask 523264
        %v318 = vsel %vm316, %v276, 0
        %320 = vmatprep.subr.bf16.mxu0 0
        %321 = vmatpush1.bf16.msra.mxu0 0
        %322 = vmatprep.subr.bf16.mxu0 0
        %323 = vmatpush1.bf16.msra.mxu0 0
        %324 = vmatprep.subr.bf16.mxu0 0
        %325 = vmatpush1.bf16.msra.mxu0 0
        %326 = vmatprep.subr.bf16.mxu0 0
        %327 = vmatpush1.bf16.msra.mxu0 0
        %328 = vmatprep.subr.bf16.mxu0 0
        %329 = vmatpush1.bf16.msra.mxu0 %v311
        %330 = vmatprep.subr.bf16.mxu0 0
        %331 = vmatpush1.bf16.msra.mxu0 %v310
        %332 = vmatprep.subr.bf16.mxu0 0
        %333 = vmatpush1.bf16.msra.mxu0 %v309
        %334 = vmatprep.subr.bf16.mxu0 0
        %335 = vmatpush1.bf16.msra.mxu0 %v308
        %336 = vmatprep.subr.bf16.mxu0 0
        %337 = vmatpush2.bf16.msra.mxu0 0
        %338 = vmatprep.subr.bf16.mxu0 0
        %339 = vmatpush2.bf16.msra.mxu0 0
        %340 = vmatprep.subr.bf16.mxu0 0
        %341 = vmatpush2.bf16.msra.mxu0 0
        %342 = vmatprep.subr.bf16.mxu0 0
        %343 = vmatpush2.bf16.msra.mxu0 0
        %344 = vmatprep.subr.bf16.mxu0 0
        %345 = vmatpush2.bf16.msra.mxu0 0
        %346 = vmatprep.subr.bf16.mxu0 0
        %347 = vmatpush2.bf16.msra.mxu0 0
        %348 = vmatprep.subr.bf16.mxu0 0
        %349 = vmatpush2.bf16.msra.mxu0 0
        %350 = vmatprep.subr.bf16.mxu0 0
        %351 = vmatpush2.bf16.msra.mxu0 0
        %352 = vmatprep.mubr.bf16.mxu0 0
        %353 = vmatmul.mubr.bf16.gmra.mxu0 %v318
        %v354 = vpop.f32.mrf.mxu0
        %v355 = vadd.f32 %v290, %v354
        %v356 = vpop.f32.mrf.mxu0
        %v357 = vpop.f32.mrf.mxu0
        %v358 = vpop.f32.mrf.mxu0
        %359 = vdwg.mxu0
        %v360 = vmax.f32 %v355, 0.0
        %v361 = vpack.c.bf16 %v360, %v360
        %v362 = vld [vmem:[%s3] sm:$0xf]
        %v363 = vld [vmem:[%s3 + $0x4] sm:$0xf]
        %v364 = vld [vmem:[%s3 + $0x8] sm:$0xf]
        %v365 = vld [vmem:[%s3 + $0xc] sm:$0xf]
        %v366 = vld [vmem:[%s3 + $0x10] sm:$0xf]
        %v367 = vld [vmem:[%s3 + $0x14] sm:$0xf]
        %v368 = vld [vmem:[%s3 + $0x18] sm:$0xf]
        %v369 = vld [vmem:[%s3 + $0x1c] sm:$0xf]
        %v370 = vld [vmem:[%s3 + $0x20] sm:$0xf]
        %v371 = vld [vmem:[%s3 + $0x24] sm:$0xf]
        %v372 = vld [vmem:[%s3 + $0x28] sm:$0xf]
        %v373 = vld [vmem:[%s3 + $0x2c] sm:$0xf]
        %v374 = vld [vmem:[%s3 + $0x30] sm:$0xf]
        %v375 = vld [vmem:[%s3 + $0x34] sm:$0xf]
        %v376 = vld [vmem:[%s3 + $0x38] sm:$0xf]
        %v377 = vld [vmem:[%s3 + $0x3c] sm:$0xf]
        %v378 = vld [vmem:[%s4] sm:$0x1]
        %v380 = vlaneseq
        %v381 = vshrl.u32 %v380, 7
        %v382 = vsub.s32 0, %v381
        %v383 = vrot.slane %v378, %v382
        %v401 = vunpack.c.l.b16 %v362
        %v402 = vunpack.c.l.b16 %v363
        %v403 = vunpack.c.l.b16 %v364
        %v404 = vunpack.c.l.b16 %v365
        %v405 = vunpack.c.l.b16 %v366
        %v406 = vunpack.c.l.b16 %v367
        %v407 = vunpack.c.l.b16 %v368
        %v408 = vunpack.c.l.b16 %v369
        %v409 = vunpack.c.l.b16 %v370
        %v410 = vunpack.c.l.b16 %v371
        %v411 = vunpack.c.l.b16 %v372
        %v412 = vunpack.c.l.b16 %v373
        %v413 = vunpack.c.l.b16 %v374
        %v414 = vunpack.c.l.b16 %v375
        %v415 = vunpack.c.l.b16 %v376
        %v416 = vunpack.c.l.b16 %v377
        %v417 = vpack.c.b16 %v402, %v401
        %v418 = vpack.c.b16 %v404, %v403
        %v419 = vpack.c.b16 %v406, %v405
        %v420 = vpack.c.b16 %v408, %v407
        %v421 = vpack.c.b16 %v410, %v409
        %v422 = vpack.c.b16 %v412, %v411
        %v423 = vpack.c.b16 %v414, %v413
        %v424 = vpack.c.b16 %v416, %v415
        %433 = vmatprep.subr.bf16.mxu0 0
        %434 = vmatpush1.bf16.msra.mxu0 %v424
        %435 = vmatprep.subr.bf16.mxu0 0
        %436 = vmatpush1.bf16.msra.mxu0 %v423
        %437 = vmatprep.subr.bf16.mxu0 0
        %438 = vmatpush1.bf16.msra.mxu0 %v422
        %439 = vmatprep.subr.bf16.mxu0 0
        %440 = vmatpush1.bf16.msra.mxu0 %v421
        %441 = vmatprep.subr.bf16.mxu0 0
        %442 = vmatpush1.bf16.msra.mxu0 %v420
        %443 = vmatprep.subr.bf16.mxu0 0
        %444 = vmatpush1.bf16.msra.mxu0 %v419
        %445 = vmatprep.subr.bf16.mxu0 0
        %446 = vmatpush1.bf16.msra.mxu0 %v418
        %447 = vmatprep.subr.bf16.mxu0 0
        %448 = vmatpush1.bf16.msra.mxu0 %v417
        %449 = vmatprep.subr.bf16.mxu0 0
        %450 = vmatpush2.bf16.msra.mxu0 0
        %451 = vmatprep.subr.bf16.mxu0 0
        %452 = vmatpush2.bf16.msra.mxu0 0
        %453 = vmatprep.subr.bf16.mxu0 0
        %454 = vmatpush2.bf16.msra.mxu0 0
        %455 = vmatprep.subr.bf16.mxu0 0
        %456 = vmatpush2.bf16.msra.mxu0 0
        %457 = vmatprep.subr.bf16.mxu0 0
        %458 = vmatpush2.bf16.msra.mxu0 0
        %459 = vmatprep.subr.bf16.mxu0 0
        %460 = vmatpush2.bf16.msra.mxu0 0
        %461 = vmatprep.subr.bf16.mxu0 0
        %462 = vmatpush2.bf16.msra.mxu0 0
        %463 = vmatprep.subr.bf16.mxu0 0
        %464 = vmatpush2.bf16.msra.mxu0 0
        %465 = vmatprep.mubr.bf16.mxu0 0
        %466 = vmatmul.mubr.bf16.gmra.mxu0 %v361
        %v467 = vpop.f32.mrf.mxu0
        %v468 = vadd.f32 %v383, %v467
        %v469 = vpop.f32.mrf.mxu0
        %v470 = vpop.f32.mrf.mxu0
        %v471 = vpop.f32.mrf.mxu0
        %472 = vdwg.mxu0
        %v473 = vmax.f32 %v468, 0.0
        %v474 = vpack.c.bf16 %v473, %v473
        %v475 = vld [vmem:[%s5] sm:$0xf]
        %v476 = vld [vmem:[%s5 + $0x4] sm:$0xf]
        %v477 = vld [vmem:[%s5 + $0x8] sm:$0xf]
        %v478 = vld [vmem:[%s5 + $0xc] sm:$0xf]
        %v479 = vld [vmem:[%s5 + $0x10] sm:$0xf]
        %v480 = vld [vmem:[%s5 + $0x14] sm:$0xf]
        %v481 = vld [vmem:[%s5 + $0x18] sm:$0xf]
        %v482 = vld [vmem:[%s5 + $0x1c] sm:$0xf]
        %v483 = vld [vmem:[%s5 + $0x20] sm:$0xf]
        %v484 = vld [vmem:[%s5 + $0x24] sm:$0xf]
        %v485 = vld [vmem:[%s5 + $0x28] sm:$0xf]
        %v486 = vld [vmem:[%s5 + $0x2c] sm:$0xf]
        %v487 = vld [vmem:[%s5 + $0x30] sm:$0xf]
        %v488 = vld [vmem:[%s5 + $0x34] sm:$0xf]
        %v489 = vld [vmem:[%s5 + $0x38] sm:$0xf]
        %v490 = vld [vmem:[%s5 + $0x3c] sm:$0xf]
        %v491 = vld [vmem:[%s6] sm:$0x1]
        %v493 = vlaneseq
        %v494 = vshrl.u32 %v493, 7
        %v495 = vsub.s32 0, %v494
        %v496 = vrot.slane %v491, %v495
        %v514 = vunpack.c.l.b16 %v475
        %v515 = vunpack.c.l.b16 %v476
        %v516 = vunpack.c.l.b16 %v477
        %v517 = vunpack.c.l.b16 %v478
        %v518 = vunpack.c.l.b16 %v479
        %v519 = vunpack.c.l.b16 %v480
        %v520 = vunpack.c.l.b16 %v481
        %v521 = vunpack.c.l.b16 %v482
        %v522 = vunpack.c.l.b16 %v483
        %v523 = vunpack.c.l.b16 %v484
        %v524 = vunpack.c.l.b16 %v485
        %v525 = vunpack.c.l.b16 %v486
        %v526 = vunpack.c.l.b16 %v487
        %v527 = vunpack.c.l.b16 %v488
        %v528 = vunpack.c.l.b16 %v489
        %v529 = vunpack.c.l.b16 %v490
        %v530 = vpack.c.b16 %v515, %v514
        %v531 = vpack.c.b16 %v517, %v516
        %v532 = vpack.c.b16 %v519, %v518
        %v533 = vpack.c.b16 %v521, %v520
        %v534 = vpack.c.b16 %v523, %v522
        %v535 = vpack.c.b16 %v525, %v524
        %v536 = vpack.c.b16 %v527, %v526
        %v537 = vpack.c.b16 %v529, %v528
        %546 = vmatprep.subr.bf16.mxu0 0
        %547 = vmatpush1.bf16.msra.mxu0 %v537
        %548 = vmatprep.subr.bf16.mxu0 0
        %549 = vmatpush1.bf16.msra.mxu0 %v536
        %550 = vmatprep.subr.bf16.mxu0 0
        %551 = vmatpush1.bf16.msra.mxu0 %v535
        %552 = vmatprep.subr.bf16.mxu0 0
        %553 = vmatpush1.bf16.msra.mxu0 %v534
        %554 = vmatprep.subr.bf16.mxu0 0
        %555 = vmatpush1.bf16.msra.mxu0 %v533
        %556 = vmatprep.subr.bf16.mxu0 0
        %557 = vmatpush1.bf16.msra.mxu0 %v532
        %558 = vmatprep.subr.bf16.mxu0 0
        %559 = vmatpush1.bf16.msra.mxu0 %v531
        %560 = vmatprep.subr.bf16.mxu0 0
        %561 = vmatpush1.bf16.msra.mxu0 %v530
        %562 = vmatprep.subr.bf16.mxu0 0
        %563 = vmatpush2.bf16.msra.mxu0 0
        %564 = vmatprep.subr.bf16.mxu0 0
        %565 = vmatpush2.bf16.msra.mxu0 0
        %566 = vmatprep.subr.bf16.mxu0 0
        %567 = vmatpush2.bf16.msra.mxu0 0
        %568 = vmatprep.subr.bf16.mxu0 0
        %569 = vmatpush2.bf16.msra.mxu0 0
        %570 = vmatprep.subr.bf16.mxu0 0
        %571 = vmatpush2.bf16.msra.mxu0 0
        %572 = vmatprep.subr.bf16.mxu0 0
        %573 = vmatpush2.bf16.msra.mxu0 0
        %574 = vmatprep.subr.bf16.mxu0 0
        %575 = vmatpush2.bf16.msra.mxu0 0
        %576 = vmatprep.subr.bf16.mxu0 0
        %577 = vmatpush2.bf16.msra.mxu0 0
        %578 = vmatprep.mubr.bf16.mxu0 0
        %579 = vmatmul.mubr.bf16.gmra.mxu0 %v474
        %v580 = vpop.f32.mrf.mxu0
        %v581 = vadd.f32 %v496, %v580
        %v582 = vpop.f32.mrf.mxu0
        %v583 = vpop.f32.mrf.mxu0
        %v584 = vpop.f32.mrf.mxu0
        %585 = vdwg.mxu0
        %vm586 = vcmask 130048
        %587 = vst.msk [vmem:[%s269] sm:$0xff] %vm586, %v581
        %s588 = sand.u32 %s181, 1
        %s589 = scalar_lea.sflag [#allocation3], %s588
        %s590 = sand.u32 %s181, 1
        %s591 = smul.addr %s590, 8
        %s592 = scalar_lea.vmem [#allocation2], %s591
        // Predicated region
        $region49: #{neural_net_forward.1} parent=47 // pred_check
          %p593 = pneg %p191
        $region50: #{neural_net_forward.1} parent=47 // pred_check_branch
          %595 = sbr.rel (%p593) target = $region52
        $region51: #{neural_net_forward.1} parent=47 // pred_region
          %s597 = ssub.s32 128, 128
          %598 = vsyncadd %s589, %s597
          %s599 = smul.addr %s21, 128
          %s600 = scalar_lea.hbm %s7, %s599
          %s602 = sshll.u32 %s592, 4
          %s603 = int_to_ptr.vmem [resolvable:$true] %s602
          %605 = dma.vmem_to_hbm [thread:$0]  %s603, 128, %s600, %s589
        $region52: #{neural_net_forward.1} parent=47 // pred_fallthru
          _
      $region48: #{neural_net_forward.1} parent=5 // pred_fallthru
        _
      %p606 = scmp.le.s32.totalorder 2, %s16
      // Predicated region
      $region53: #{neural_net_forward.1} parent=5 // pred_check
        %p607 = pneg %p606
      $region54: #{neural_net_forward.1} parent=5 // pred_check_branch
        %609 = sbr.rel (%p607) target = $region56
      $region55: #{neural_net_forward.1} parent=5 // pred_region
        %s610 = ssub.s32 %s16, 2
        // Predicated region
        $region57: #{neural_net_forward.1} parent=55 // pred_check
          %p611 = pneg %p197
        $region58: #{neural_net_forward.1} parent=55 // pred_check_branch
          %613 = sbr.rel (%p611) target = $region60
        $region59: #{neural_net_forward.1} parent=55 // pred_region
          %s614 = sand.u32 %s182, 1
          %s615 = scalar_lea.sflag [#allocation3], %s614
          %s616 = sand.u32 %s182, 1
          %s617 = smul.addr %s616, 8
          %s618 = scalar_lea.vmem [#allocation2], %s617
          %619 = dma.done %s615, 128
        $region60: #{neural_net_forward.1} parent=55 // pred_fallthru
          _
      $region56: #{neural_net_forward.1} parent=5 // pred_fallthru
        _
    $region6: #{neural_net_forward.1} parent=1 // loop_footer
      %s20 = sadd.s32 1, %s16
    $region7: #{neural_net_forward.1} parent=1 // loop_footer_branch
      %15 = sbr.rel target = $region3
    $region8: #{neural_net_forward.1} parent=1 // loop_exit
      _
    %620 = vsyncpa [#allocation3], 1
    %s621 = scalar_lea.sflag [#allocation3], 1
    %622 = vsyncpa %s621, 1

</llo_original>
